<compile_context>
chip_gen: v5e
topology: v5e:2x2
jax: 0.10.0
libtpu: 0.0.40
codegen_flags: <defaults>
</compile_context>

<pallas_src>
import jax
import jax.numpy as jnp
from jax.experimental import pallas as pl
from jax.experimental.pallas import tpu as pltpu


# ---------------- Config (mirrors the PyTorch Config) ----------------
SEQ_LEN = 96
PRED_LEN = 24

_RESIDENT_VMEM_BUDGET = 32 << 20   # keep the resident path well under v7x's 64 MiB
_VMEM_LIMIT_CAP = 48 << 20


def _round_up(x, m):
    return ((x + m - 1) // m) * m


def _largest_tile(extent, cap):
    """Largest multiple of 128 that divides `extent` (itself a multiple of 128)
    and is <= cap (falls back to 128)."""
    best = 128
    t = 128
    limit = min(extent, cap)
    while t <= limit:
        if extent % t == 0:
            best = t
        t += 128
    return best


# ---------------- Pallas kernels ----------------
def _linear_kernel_nosplit(x_ref, wt_ref, b_ref, o_ref):
    # Single K pass: dot + bias straight to the output tile (no acc, no pl.when).
    x = x_ref[...].astype(wt_ref.dtype)
    o_ref[...] = (
        jnp.dot(x, wt_ref[...], preferred_element_type=jnp.float32) + b_ref[...]
    ).astype(o_ref.dtype)


def _linear_kernel_acc(x_ref, wt_ref, b_ref, o_ref, acc_ref):
    # K-tiled path: f32 VMEM accumulator, reduction axis last.
    k = pl.program_id(2)

    @pl.when(k == 0)
    def _():
        acc_ref[...] = jnp.zeros_like(acc_ref)

    acc_ref[...] += jnp.dot(
        x_ref[...].astype(wt_ref.dtype), wt_ref[...],
        preferred_element_type=jnp.float32,
    )

    @pl.when(k == pl.num_programs(2) - 1)
    def _():
        o_ref[...] = (acc_ref[...] + b_ref[...]).astype(o_ref.dtype)


# ---------------- One-time parameter preparation (outside the hot path) ----
def prepare_params(weight, bias, compute_dtype=jnp.bfloat16):
    """weight: (N, K) torch nn.Linear layout, bias: (N,).
    Transpose once, pad only to multiples of 128 (lane-dense, no tile padding),
    cast weight to the MXU compute dtype."""
    N, K = weight.shape
    Kp = _round_up(K, 128)
    Np = _round_up(N, 128)
    wt = jnp.pad(weight.T, ((0, Kp - K), (0, Np - N))).astype(compute_dtype)
    b = jnp.pad(bias.astype(jnp.float32), (0, Np - N)).reshape(1, Np)
    return wt, b, (K, N)


# ---------------- Tiling / path selection ----------------
def _plan(B, Kp, Np):
    # Batch tiling: full-batch block when small (no padding copy), 256 when large.
    if B <= 256:
        tm = B if B % 8 == 0 else _round_up(B, 8)
        Bp = tm
    else:
        tm = 256
        Bp = _round_up(B, 256)
    nb = Bp // tm

    # ---- Resident fast path: whole weight lives in VMEM, single K pass ----
    tn_res = Np
    if nb == 1 and Np >= 256:
        # Expose >=2 parallel blocks so v7x's second TensorCore gets work.
        tn_res = _largest_tile(Np, Np // 2)
    nj_res = Np // tn_res
    res_est = 2 * (tm * Kp * 4 + Kp * tn_res * 2 + tn_res * 4 + tm * tn_res * 4)
    if res_est <= _RESIDENT_VMEM_BUDGET:
        return dict(resident=True, tm=tm, Bp=Bp, nb=nb,
                    tk=Kp, nk=1, tn=tn_res, nj=nj_res, vmem_est=res_est)

    # ---- Tiled path for large weights ----
    tk = _largest_tile(Kp, 2048)
    tn = _largest_tile(Np, 512)
    nk = Kp // tk
    nj = Np // tn
    x_item = 2 if nj > 1 else 4
    est = 2 * (tm * tk * x_item + tk * tn * 2 + tn * 4 + tm * tn * 4)
    if nk > 1:
        est += tm * tn * 4
    return dict(resident=False, tm=tm, Bp=Bp, nb=nb,
                tk=tk, nk=nk, tn=tn, nj=nj, vmem_est=est)


# ---------------- Forward ----------------
def simple_fedformer_forward(x, wt_padded, bias_padded, logical_kn):
    """x: (B, seq_len, input_dim) float32
       wt_padded:   (Kp, Np) bf16  (from prepare_params)
       bias_padded: (1, Np)  f32   (from prepare_params)
       returns: (B, pred_len, input_dim) float32"""
    B, S, D = x.shape
    K, N = logical_kn
    assert K == S * D, "weight was prepared for a different seq_len/input_dim"
    Kp, Np = wt_padded.shape
    assert Kp == _round_up(K, 128) and Np == _round_up(N, 128), \
        "wt_padded geometry does not match prepare_params()"
    compute_dtype = wt_padded.dtype

    p = _plan(B, Kp, Np)
    tm, Bp, nb = p["tm"], p["Bp"], p["nb"]
    tk, nk, tn, nj = p["tk"], p["nk"], p["tn"], p["nj"]

    # Row-major flatten == torch .reshape.  Only pre-cast activations to the
    # compute dtype when the kernel will re-stream them (tiled path, nj > 1);
    # otherwise the bf16 cast happens on the fly inside the kernel.
    x2d = x.reshape(B, K)
    if (not p["resident"]) and nj > 1:
        x2d = x2d.astype(compute_dtype)
    if Bp > B or Kp > K:
        x2d = jnp.pad(x2d, ((0, Bp - B), (0, Kp - K)))

    x_item = jnp.dtype(x2d.dtype).itemsize
    cost = pl.CostEstimate(
        flops=2 * Bp * Kp * Np,
        transcendentals=0,
        bytes_accessed=(nb * Kp * Np * 2                                  # weight
                        + (1 if p["resident"] else nj) * Bp * Kp * x_item  # x
                        + Bp * Np * 4                                      # out
                        + nb * Np * 4),                                    # bias
    )
    vmem_limit = int(min(max(2 * p["vmem_est"], 16 << 20), _VMEM_LIMIT_CAP))

    if nk == 1:
        grid = (nb, nj)
        kernel = _linear_kernel_nosplit
        in_specs = [
            pl.BlockSpec((tm, tk), lambda i, j: (i, 0)),
            pl.BlockSpec((tk, tn), lambda i, j: (0, j)),
            pl.BlockSpec((1, tn), lambda i, j: (0, j)),
        ]
        out_specs = pl.BlockSpec((tm, tn), lambda i, j: (i, j))
        scratch_shapes = []
        dim_sem = ("parallel", "parallel")
    else:
        grid = (nb, nj, nk)
        kernel = _linear_kernel_acc
        in_specs = [
            pl.BlockSpec((tm, tk), lambda i, j, k: (i, k)),
            pl.BlockSpec((tk, tn), lambda i, j, k: (k, j)),
            pl.BlockSpec((1, tn), lambda i, j, k: (0, j)),
        ]
        out_specs = pl.BlockSpec((tm, tn), lambda i, j, k: (i, j))
        scratch_shapes = [pltpu.VMEM((tm, tn), jnp.float32)]
        dim_sem = ("parallel", "parallel", "arbitrary")

    out2d = pl.pallas_call(
        kernel,
        out_shape=jax.ShapeDtypeStruct((Bp, Np), jnp.float32),
        grid_spec=pltpu.PrefetchScalarGridSpec(
            num_scalar_prefetch=0,
            grid=grid,
            in_specs=in_specs,
            out_specs=out_specs,
            scratch_shapes=scratch_shapes,
        ),
        compiler_params=pltpu.CompilerParams(
            dimension_semantics=dim_sem,
            vmem_limit_bytes=vmem_limit,
        ),
        cost_estimate=cost,
    )(x2d, wt_padded, bias_padded)

    out2d = out2d[:B, :N]
    return out2d.reshape(B, PRED_LEN, N // PRED_LEN)


# ---------------- Parameter init (deterministic, torch-style uniform) ------
def init_params(key, input_dim):
    in_features = SEQ_LEN * input_dim
    out_features = PRED_LEN * input_dim
    kw, kb = jax.random.split(key)
    bound = 1.0 / (in_features ** 0.5)
    weight = jax.random.uniform(
        kw, (out_features, in_features), jnp.float32, minval=-bound, maxval=bound
    )
    bias = jax.random.uniform(
        kb, (out_features,), jnp.float32, minval=-bound, maxval=bound
    )
    return weight, bias


if __name__ == "__main__":
    key = jax.random.PRNGKey(0)
    k_x, k_p = jax.random.split(key)

    batch = 2
    input_dim = 4

    x = jax.random.normal(k_x, (batch, SEQ_LEN, input_dim), dtype=jnp.float32)
    weight, bias = init_params(k_p, input_dim)

    # One-time prep (transpose / 128-pad / bf16 cast) — not on the per-call path.
    wt_p, b_p, kn = prepare_params(weight, bias)

    out = simple_fedformer_forward(x, wt_p, b_p, kn)
    out = jax.block_until_ready(out)

    # Reference: same math in plain JAX with the same bf16 rounding of x and W
    # (kernel accumulates in f32 on the MXU, so this should match tightly).
    xb = x.astype(jnp.bfloat16).astype(jnp.float32)
    wb = weight.astype(jnp.bfloat16).astype(jnp.float32)
    ref = (
        jnp.dot(xb.reshape(batch, -1), wb.T, precision=jax.lax.Precision.HIGHEST)
        + bias
    ).reshape(batch, PRED_LEN, input_dim)

    assert out.shape == (batch, PRED_LEN, input_dim)
    assert jnp.allclose(out, ref, atol=1e-3, rtol=1e-3), \
        float(jnp.max(jnp.abs(out - ref)))

    print("KERNEL_OK")
</pallas_src>

<mosaic_0001>
module attributes {stable_mosaic.version = 11 : i64} {
  func.func @_linear_kernel_nosplit(%arg0: i32, %arg1: i32, %arg2: memref<8x384xf32, #tpu.memory_space<vmem>>, %arg3: memref<384x128xbf16, #tpu.memory_space<vmem>>, %arg4: memref<1x128xf32, #tpu.memory_space<vmem>>, %arg5: memref<8x128xf32, #tpu.memory_space<vmem>>) attributes {dimension_semantics = [#tpu.dimension_semantics<parallel>, #tpu.dimension_semantics<parallel>], iteration_bounds = array<i64: 1, 1>, scalar_prefetch = 0 : i64, scratch_operands = 0 : i64, tpu.core_type = #tpu.core_type<tc>, window_params = [{transform_indices = @transform_0, window_bounds = array<i64: 8, 384>}, {transform_indices = @transform_1, window_bounds = array<i64: 384, 128>}, {transform_indices = @transform_2, window_bounds = array<i64: 1, 128>}, {transform_indices = @transform_3, window_bounds = array<i64: 8, 128>}]} {
    %c0 = arith.constant 0 : index
    %c0_0 = arith.constant 0 : index
    %0 = vector.load %arg2[%c0, %c0_0] : memref<8x384xf32, #tpu.memory_space<vmem>>, vector<8x384xf32>
    %1 = arith.truncf %0 : vector<8x384xf32> to vector<8x384xbf16>
    %c0_1 = arith.constant 0 : index
    %c0_2 = arith.constant 0 : index
    %2 = vector.load %arg3[%c0_1, %c0_2] : memref<384x128xbf16, #tpu.memory_space<vmem>>, vector<384x128xbf16>
    %cst = arith.constant dense<0.000000e+00> : vector<8x128xf32>
    %3 = tpu.matmul %1, %2, %cst {dimension_numbers = #tpu.dot_dimension_numbers<[1], [0], [0], [1], [0, 0, 1, 1], [], []>} : vector<8x384xbf16>, vector<384x128xbf16>, vector<8x128xf32> -> vector<8x128xf32>
    %c0_3 = arith.constant 0 : index
    %c0_4 = arith.constant 0 : index
    %4 = vector.load %arg4[%c0_3, %c0_4] : memref<1x128xf32, #tpu.memory_space<vmem>>, vector<1x128xf32>
    %5 = vector.broadcast %4 : vector<1x128xf32> to vector<8x128xf32>
    %6 = arith.addf %3, %5 : vector<8x128xf32>
    %c0_5 = arith.constant 0 : index
    %c0_6 = arith.constant 0 : index
    %7 = vector.load %arg5[%c0_5, %c0_6] : memref<8x128xf32, #tpu.memory_space<vmem>>, vector<8x128xf32>
    tpu.vector_store %arg5[%c0_5, %c0_6], %6 {strides = array<i32>} : memref<8x128xf32, #tpu.memory_space<vmem>>, vector<8x128xf32>,
    return
  }
  func.func @transform_0(%arg0: i32, %arg1: i32) -> (i32, i32) {
    %c0_i32 = arith.constant 0 : i32
    %c0_i32_0 = arith.constant 0 : i32
    return %arg0, %c0_i32 : i32, i32
  }
  func.func @transform_1(%arg0: i32, %arg1: i32) -> (i32, i32) {
    %c0_i32 = arith.constant 0 : i32
    %c0_i32_0 = arith.constant 0 : i32
    return %c0_i32, %arg1 : i32, i32
  }
  func.func @transform_2(%arg0: i32, %arg1: i32) -> (i32, i32) {
    %c0_i32 = arith.constant 0 : i32
    %c0_i32_0 = arith.constant 0 : i32
    return %c0_i32, %arg1 : i32, i32
  }
  func.func @transform_3(%arg0: i32, %arg1: i32) -> (i32, i32) {
    %c0_i32 = arith.constant 0 : i32
    return %arg0, %arg1 : i32, i32
  }
}

</mosaic_0001>

<llo_original>
// kernel: tpu_custom_call.1
$region0: #{tpu_custom_call.1}
  #allocation0 [shape = 'u32[]', space=smem, size = 0x4, offset = 0x4, fixed_abs, tag = 'smem constant byte address 0x4 - core index']
  #allocation1 [shape = 'u32[72,128]{1,0:T(1,128)}', space=vmem, size = 0x9000, scoped, tag = 'internal scratch']
  %s0 = inlined_call_operand.hbm [shape: f32[8,384], index: 0, kind: input, shape index: {}]
  %s1 = inlined_call_operand.hbm [shape: bf16[384,128], index: 1, kind: input, shape index: {}]
  %s2 = inlined_call_operand.vmem [shape: f32[1,128], index: 2, kind: input, shape index: {}]
  %s3 = inlined_call_operand.hbm [shape: f32[8,128], index: 3, kind: output, shape index: {}]
  %s4 = sld [smem:[#allocation0]]
  $region30: #{tpu_custom_call.1} parent=0
    _
  %s6 = ssub.s32 1, %s4
  %s7 = scalar_select 0, %s6, %s4
  $region1: #{tpu_custom_call.1} parent=0
    #allocation2 [shape = 'u8[12288]{0}', space=vmem, size = 0x3000, scoped, tag = 'input window, operand 0, single buffered']
    #allocation3 [shape = 's32[1]{0}', space=sflag, size = 0x4, scoped, tag = 'scoped memory for tpu_custom_call.1']
    #allocation4 [shape = 's32[1]{0}', space=sflag, size = 0x4, scoped, tag = 'scoped memory for tpu_custom_call.1']
    #allocation5 [shape = 'u8[98304]{0}', space=vmem, size = 0x18000, scoped, tag = 'input window, operand 1, single buffered']
    #allocation6 [shape = 's32[1]{0}', space=sflag, size = 0x4, scoped, tag = 'scoped memory for tpu_custom_call.1']
    #allocation7 [shape = 'u8[4096]{0}', space=vmem, size = 0x1000, scoped, tag = 'output window, operand 0, single buffered']
    %8 = vsyncpa [#allocation3], 0
    %9 = vsyncpa [#allocation6], 0
    %10 = vsyncpa [#allocation4], 0
    // Predicated region
    $region2: #{tpu_custom_call.1} parent=1 // pred_check
      _
    $region3: #{tpu_custom_call.1} parent=1 // pred_check_branch
      %12 = sbr.rel (0) target = $region5
    $region4: #{tpu_custom_call.1} parent=1 // pred_region
      %14 = vsyncadd [#allocation3], 0
      %s16 = sshll.u32 %s0, 4
      %s17 = int_to_ptr.hbm [resolvable:$true] %s16
      %s18 = sshll.u32 [#allocation2], 4
      %s19 = int_to_ptr.vmem [resolvable:$true] %s18
      %21 = dma.hbm_to_vmem [thread:$0]  %s17, 384, %s19, [#allocation3]
    $region5: #{tpu_custom_call.1} parent=1 // pred_fallthru
      _
    // Predicated region
    $region6: #{tpu_custom_call.1} parent=1 // pred_check
      _
    $region7: #{tpu_custom_call.1} parent=1 // pred_check_branch
      %23 = sbr.rel (0) target = $region9
    $region8: #{tpu_custom_call.1} parent=1 // pred_region
      %25 = vsyncadd [#allocation6], 0
      %s26 = sshll.u32 %s1, 4
      %s27 = int_to_ptr.hbm [resolvable:$true] %s26
      %s28 = sshll.u32 [#allocation5], 4
      %s29 = int_to_ptr.vmem [resolvable:$true] %s28
      %34 = dma.hbm_to_vmem [thread:$0]  %s27, 3072, %s29, [#allocation6], 64, 64, 4
    $region9: #{tpu_custom_call.1} parent=1 // pred_fallthru
      _
    // Predicated region
    $region10: #{tpu_custom_call.1} parent=1 // pred_check
      _
    $region11: #{tpu_custom_call.1} parent=1 // pred_check_branch
      %36 = sbr.rel (0) target = $region13
    $region12: #{tpu_custom_call.1} parent=1 // pred_region
      _
    $region13: #{tpu_custom_call.1} parent=1 // pred_fallthru
      _
    // Predicated region
    $region14: #{tpu_custom_call.1} parent=1 // pred_check
      _
    $region15: #{tpu_custom_call.1} parent=1 // pred_check_branch
      %38 = sbr.rel (0) target = $region17
    $region16: #{tpu_custom_call.1} parent=1 // pred_region
      %40 = dma.done [#allocation3], 384
    $region17: #{tpu_custom_call.1} parent=1 // pred_fallthru
      _
    // Predicated region
    $region18: #{tpu_custom_call.1} parent=1 // pred_check
      _
    $region19: #{tpu_custom_call.1} parent=1 // pred_check_branch
      %42 = sbr.rel (0) target = $region21
    $region20: #{tpu_custom_call.1} parent=1 // pred_region
      %44 = dma.done [#allocation6], 3072
    $region21: #{tpu_custom_call.1} parent=1 // pred_fallthru
      _
    %v45 = vld [vmem:[#allocation2] sm:$0xff]
    %v46 = vld [vmem:[#allocation2 + $0x8] sm:$0xff]
    %v47 = vld [vmem:[#allocation2 + $0x10] sm:$0xff]
    %v48 = vpack.c.bf16 %v45, %v45
    %v49 = vpack.c.bf16 %v46, %v46
    %v50 = vpack.c.bf16 %v47, %v47
    %v51 = vld [vmem:[#allocation5] sm:$0xf]
    %v52 = vld [vmem:[#allocation5 + $0x4] sm:$0xf]
    %v53 = vld [vmem:[#allocation5 + $0x8] sm:$0xf]
    %v54 = vld [vmem:[#allocation5 + $0xc] sm:$0xf]
    %v55 = vld [vmem:[#allocation5 + $0x10] sm:$0xf]
    %v56 = vld [vmem:[#allocation5 + $0x14] sm:$0xf]
    %v57 = vld [vmem:[#allocation5 + $0x18] sm:$0xf]
    %v58 = vld [vmem:[#allocation5 + $0x1c] sm:$0xf]
    %v59 = vld [vmem:[#allocation5 + $0x20] sm:$0xf]
    %v60 = vld [vmem:[#allocation5 + $0x24] sm:$0xf]
    %v61 = vld [vmem:[#allocation5 + $0x28] sm:$0xf]
    %v62 = vld [vmem:[#allocation5 + $0x2c] sm:$0xf]
    %v63 = vld [vmem:[#allocation5 + $0x30] sm:$0xf]
    %v64 = vld [vmem:[#allocation5 + $0x34] sm:$0xf]
    %v65 = vld [vmem:[#allocation5 + $0x38] sm:$0xf]
    %v66 = vld [vmem:[#allocation5 + $0x3c] sm:$0xf]
    %v67 = vld [vmem:[#allocation5 + $0x40] sm:$0xf]
    %v68 = vld [vmem:[#allocation5 + $0x44] sm:$0xf]
    %v69 = vld [vmem:[#allocation5 + $0x48] sm:$0xf]
    %v70 = vld [vmem:[#allocation5 + $0x4c] sm:$0xf]
    %v71 = vld [vmem:[#allocation5 + $0x50] sm:$0xf]
    %v72 = vld [vmem:[#allocation5 + $0x54] sm:$0xf]
    %v73 = vld [vmem:[#allocation5 + $0x58] sm:$0xf]
    %v74 = vld [vmem:[#allocation5 + $0x5c] sm:$0xf]
    %v75 = vld [vmem:[#allocation5 + $0x60] sm:$0xf]
    %v76 = vld [vmem:[#allocation5 + $0x64] sm:$0xf]
    %v77 = vld [vmem:[#allocation5 + $0x68] sm:$0xf]
    %v78 = vld [vmem:[#allocation5 + $0x6c] sm:$0xf]
    %v79 = vld [vmem:[#allocation5 + $0x70] sm:$0xf]
    %v80 = vld [vmem:[#allocation5 + $0x74] sm:$0xf]
    %v81 = vld [vmem:[#allocation5 + $0x78] sm:$0xf]
    %v82 = vld [vmem:[#allocation5 + $0x7c] sm:$0xf]
    %v83 = vld [vmem:[#allocation5 + $0x80] sm:$0xf]
    %v84 = vld [vmem:[#allocation5 + $0x84] sm:$0xf]
    %v85 = vld [vmem:[#allocation5 + $0x88] sm:$0xf]
    %v86 = vld [vmem:[#allocation5 + $0x8c] sm:$0xf]
    %v87 = vld [vmem:[#allocation5 + $0x90] sm:$0xf]
    %v88 = vld [vmem:[#allocation5 + $0x94] sm:$0xf]
    %v89 = vld [vmem:[#allocation5 + $0x98] sm:$0xf]
    %v90 = vld [vmem:[#allocation5 + $0x9c] sm:$0xf]
    %v91 = vld [vmem:[#allocation5 + $0xa0] sm:$0xf]
    %v92 = vld [vmem:[#allocation5 + $0xa4] sm:$0xf]
    %v93 = vld [vmem:[#allocation5 + $0xa8] sm:$0xf]
    %v94 = vld [vmem:[#allocation5 + $0xac] sm:$0xf]
    %v95 = vld [vmem:[#allocation5 + $0xb0] sm:$0xf]
    %v96 = vld [vmem:[#allocation5 + $0xb4] sm:$0xf]
    %v97 = vld [vmem:[#allocation5 + $0xb8] sm:$0xf]
    %v98 = vld [vmem:[#allocation5 + $0xbc] sm:$0xf]
    %v99 = vld [vmem:[%s2] sm:$0x1]
    %v101 = vperm.slane %v99, 0
    %v151 = vunpack.c.l.b16 %v51
    %v152 = vunpack.c.l.b16 %v52
    %v153 = vunpack.c.l.b16 %v53
    %v154 = vunpack.c.l.b16 %v54
    %v155 = vunpack.c.l.b16 %v55
    %v156 = vunpack.c.l.b16 %v56
    %v157 = vunpack.c.l.b16 %v57
    %v158 = vunpack.c.l.b16 %v58
    %v159 = vunpack.c.l.b16 %v59
    %v160 = vunpack.c.l.b16 %v60
    %v161 = vunpack.c.l.b16 %v61
    %v162 = vunpack.c.l.b16 %v62
    %v163 = vunpack.c.l.b16 %v63
    %v164 = vunpack.c.l.b16 %v64
    %v165 = vunpack.c.l.b16 %v65
    %v166 = vunpack.c.l.b16 %v66
    %v167 = vunpack.c.l.b16 %v67
    %v168 = vunpack.c.l.b16 %v68
    %v169 = vunpack.c.l.b16 %v69
    %v170 = vunpack.c.l.b16 %v70
    %v171 = vunpack.c.l.b16 %v71
    %v172 = vunpack.c.l.b16 %v72
    %v173 = vunpack.c.l.b16 %v73
    %v174 = vunpack.c.l.b16 %v74
    %v175 = vunpack.c.l.b16 %v75
    %v176 = vunpack.c.l.b16 %v76
    %v177 = vunpack.c.l.b16 %v77
    %v178 = vunpack.c.l.b16 %v78
    %v179 = vunpack.c.l.b16 %v79
    %v180 = vunpack.c.l.b16 %v80
    %v181 = vunpack.c.l.b16 %v81
    %v182 = vunpack.c.l.b16 %v82
    %v183 = vunpack.c.l.b16 %v83
    %v184 = vunpack.c.l.b16 %v84
    %v185 = vunpack.c.l.b16 %v85
    %v186 = vunpack.c.l.b16 %v86
    %v187 = vunpack.c.l.b16 %v87
    %v188 = vunpack.c.l.b16 %v88
    %v189 = vunpack.c.l.b16 %v89
    %v190 = vunpack.c.l.b16 %v90
    %v191 = vunpack.c.l.b16 %v91
    %v192 = vunpack.c.l.b16 %v92
    %v193 = vunpack.c.l.b16 %v93
    %v194 = vunpack.c.l.b16 %v94
    %v195 = vunpack.c.l.b16 %v95
    %v196 = vunpack.c.l.b16 %v96
    %v197 = vunpack.c.l.b16 %v97
    %v198 = vunpack.c.l.b16 %v98
    %v199 = vpack.c.b16 %v152, %v151
    %v200 = vpack.c.b16 %v154, %v153
    %v201 = vpack.c.b16 %v156, %v155
    %v202 = vpack.c.b16 %v158, %v157
    %v203 = vpack.c.b16 %v160, %v159
    %v204 = vpack.c.b16 %v162, %v161
    %v205 = vpack.c.b16 %v164, %v163
    %v206 = vpack.c.b16 %v166, %v165
    %v207 = vpack.c.b16 %v168, %v167
    %v208 = vpack.c.b16 %v170, %v169
    %v209 = vpack.c.b16 %v172, %v171
    %v210 = vpack.c.b16 %v174, %v173
    %v211 = vpack.c.b16 %v176, %v175
    %v212 = vpack.c.b16 %v178, %v177
    %v213 = vpack.c.b16 %v180, %v179
    %v214 = vpack.c.b16 %v182, %v181
    %v215 = vpack.c.b16 %v184, %v183
    %v216 = vpack.c.b16 %v186, %v185
    %v217 = vpack.c.b16 %v188, %v187
    %v218 = vpack.c.b16 %v190, %v189
    %v219 = vpack.c.b16 %v192, %v191
    %v220 = vpack.c.b16 %v194, %v193
    %v221 = vpack.c.b16 %v196, %v195
    %v222 = vpack.c.b16 %v198, %v197
    %247 = vmatpush.bf16.msra.mxu0 %v206
    %248 = vmatpush.bf16.msra.mxu0 %v205
    %249 = vmatpush.bf16.msra.mxu0 %v204
    %250 = vmatpush.bf16.msra.mxu0 %v203
    %251 = vmatpush.bf16.msra.mxu0 %v202
    %252 = vmatpush.bf16.msra.mxu0 %v201
    %253 = vmatpush.bf16.msra.mxu0 %v200
    %254 = vmatpush.bf16.msra.mxu0 %v199
    %255 = vmatmul.bf16.gmra.mxu0 %v48
    %v256 = vpop.f32.mrf.mxu0
    %v257 = vadd.f32 %v101, %v256
    %v258 = vpop.f32.mrf.mxu0
    %259 = vdwg.mxu0
    %260 = vmatpush.bf16.msra.mxu0 %v214
    %261 = vmatpush.bf16.msra.mxu0 %v213
    %262 = vmatpush.bf16.msra.mxu0 %v212
    %263 = vmatpush.bf16.msra.mxu0 %v211
    %264 = vmatpush.bf16.msra.mxu0 %v210
    %265 = vmatpush.bf16.msra.mxu0 %v209
    %266 = vmatpush.bf16.msra.mxu0 %v208
    %267 = vmatpush.bf16.msra.mxu0 %v207
    %268 = vmatmul.bf16.gmra.mxu0 %v49
    %v269 = vpop.f32.mrf.mxu0
    %v270 = vadd.f32 %v257, %v269
    %v271 = vpop.f32.mrf.mxu0
    %272 = vdwg.mxu0
    %273 = vmatpush.bf16.msra.mxu0 %v222
    %274 = vmatpush.bf16.msra.mxu0 %v221
    %275 = vmatpush.bf16.msra.mxu0 %v220
    %276 = vmatpush.bf16.msra.mxu0 %v219
    %277 = vmatpush.bf16.msra.mxu0 %v218
    %278 = vmatpush.bf16.msra.mxu0 %v217
    %279 = vmatpush.bf16.msra.mxu0 %v216
    %280 = vmatpush.bf16.msra.mxu0 %v215
    %281 = vmatmul.bf16.gmra.mxu0 %v50
    %v282 = vpop.f32.mrf.mxu0
    %v283 = vadd.f32 %v270, %v282
    %v284 = vpop.f32.mrf.mxu0
    %285 = vdwg.mxu0
    %286 = vst [vmem:[#allocation7] sm:$0xff] %v283
    // Predicated region
    $region22: #{tpu_custom_call.1} parent=1 // pred_check
      _
    $region23: #{tpu_custom_call.1} parent=1 // pred_check_branch
      %288 = sbr.rel (0) target = $region25
    $region24: #{tpu_custom_call.1} parent=1 // pred_region
      %290 = vsyncadd [#allocation4], 0
      %s292 = sshll.u32 [#allocation7], 4
      %s293 = int_to_ptr.vmem [resolvable:$true] %s292
      %s294 = sshll.u32 %s3, 4
      %s295 = int_to_ptr.hbm [resolvable:$true] %s294
      %297 = dma.vmem_to_hbm [thread:$0]  %s293, 128, %s295, [#allocation4]
    $region25: #{tpu_custom_call.1} parent=1 // pred_fallthru
      _
    // Predicated region
    $region26: #{tpu_custom_call.1} parent=1 // pred_check
      _
    $region27: #{tpu_custom_call.1} parent=1 // pred_check_branch
      %299 = sbr.rel (0) target = $region29
    $region28: #{tpu_custom_call.1} parent=1 // pred_region
      %301 = dma.done [#allocation4], 128
    $region29: #{tpu_custom_call.1} parent=1 // pred_fallthru
      _
    %302 = vsyncpa [#allocation3], 1
    %303 = vsyncpa [#allocation6], 1
    %304 = vsyncpa [#allocation4], 1

</llo_original>
